<compile_context>
chip_gen: v7x
topology: tpu7x:2x2x1
jax: 0.10.0
libtpu: 0.0.40
codegen_flags: <defaults>
</compile_context>

<pallas_src>
import functools

import jax
import jax.numpy as jnp
from jax.experimental import pallas as pl
from jax.experimental.pallas import tpu as pltpu


def _round_up(x: int, m: int) -> int:
    return ((x + m - 1) // m) * m


def _cdiv(a: int, b: int) -> int:
    return -(-a // b)


def _mse_partial_kernel(*refs, log: bool, weighted: bool, n_rows: int, tm: int,
                        mask_tail: bool):
    """One grid step: partial sum((yp - yt)^2 [* w]) (and sum(w)) for its row tile,
    broadcast into its own (8, 128) output block. No cross-step state."""
    if weighted:
        yt_ref, yp_ref, w_ref, num_ref, den_ref = refs
    else:
        yt_ref, yp_ref, num_ref = refs

    yp = yp_ref[...].astype(jnp.float32)
    yt = yt_ref[...].astype(jnp.float32)
    if log:
        yp = jnp.log(yp)
    diff = yp - yt
    sq = diff * diff                                        # (tm, D)

    if mask_tail:
        row0 = pl.program_id(0) * tm
        valid = (jax.lax.broadcasted_iota(jnp.int32, (tm, 1), 0) + row0) < n_rows
        sq = jnp.where(valid, sq, 0.0)                      # select also discards NaN/Inf garbage

    if weighted:
        w = w_ref[...].astype(jnp.float32)                  # (tm, 1)
        if mask_tail:
            w = jnp.where(valid, w, 0.0)
        row_loss = jnp.sum(sq, axis=1, keepdims=True)       # reduce lanes first, then weight
        num = jnp.sum(row_loss * w, keepdims=True)          # (1, 1)
        den = jnp.sum(w, keepdims=True)                     # (1, 1)
        num_ref[...] = jnp.broadcast_to(num, num_ref.shape)
        den_ref[...] = jnp.broadcast_to(den, den_ref.shape)
    else:
        num = jnp.sum(sq, keepdims=True)                    # (1, 1)
        num_ref[...] = jnp.broadcast_to(num, num_ref.shape)


def _vmem_sizing():
    """Generation-aware VMEM limit + double-buffered input-stream budget."""
    try:
        cap = int(pltpu.get_tpu_info().vmem_capacity_bytes)
    except Exception:
        cap = 64 * 1024 * 1024                              # conservative (v7x-sized) fallback
    limit = max(32 * 1024 * 1024, (cap * 3) // 4)           # headroom for compiler scratch
    return limit, limit // 2


def torch_loss_wrapper_mse(y_true, y_pred, sample_weight=None, *,
                           log: bool = False, tm: int | None = None):
    """Pallas equivalent of TorchLossWrapper(nn.MSELoss)(y_true, y_pred, sample_weight)."""
    y_true = jnp.asarray(y_true)
    y_pred = jnp.asarray(y_pred)
    assert y_true.ndim == 2 and y_true.shape == y_pred.shape
    N, D = y_true.shape
    weighted = sample_weight is not None
    if weighted:
        w = jnp.asarray(sample_weight).reshape(N, 1)

    vmem_limit, stream_budget = _vmem_sizing()

    # ---- row-tile sizing from the VMEM budget, then balance across the grid ----
    lanes = max(_round_up(D, 128), 128)                     # VMEM lane padding of a (tm, D) tile
    it_t, it_p = y_true.dtype.itemsize, y_pred.dtype.itemsize
    row_bytes = 2 * lanes * (it_t + it_p)                   # 2 pipeline buffers per input stream
    if weighted:
        row_bytes += 2 * 128 * w.dtype.itemsize
    align = max(8, 32 // max(1, min(it_t, it_p)))           # sublane tiling: f32->8, bf16->16
    tm_max = max(align, (stream_budget // row_bytes) // align * align)
    if tm is not None:                                      # clamp user tile to the VMEM budget
        tm_max = min(_round_up(max(int(tm), align), align), tm_max)
    tm_blk = min(tm_max, _round_up(N, align))
    g = _cdiv(N, tm_blk)                                    # pick grid count first ...
    tm_blk = _round_up(_cdiv(N, g), align)                  # ... then balance the tile
    mask_tail = (N % tm_blk) != 0

    kernel = functools.partial(_mse_partial_kernel, log=log, weighted=weighted,
                               n_rows=N, tm=tm_blk, mask_tail=mask_tail)

    in_specs = [pl.BlockSpec((tm_blk, D), lambda i: (i, 0)),
                pl.BlockSpec((tm_blk, D), lambda i: (i, 0))]
    args = [y_true, y_pred]
    if weighted:
        in_specs.append(pl.BlockSpec((tm_blk, 1), lambda i: (i, 0)))
        args.append(w)

    # Per-block partial sums: one (8, 128) lane-dense tile per grid step.
    part_struct = jax.ShapeDtypeStruct((8 * g, 128), jnp.float32)
    part_spec = pl.BlockSpec((8, 128), lambda i: (i, 0))
    if weighted:
        out_shape = (part_struct, part_struct)
        out_specs = (part_spec, part_spec)
        out_bytes = 2 * 8 * g * 128 * 4
    else:
        out_shape = part_struct
        out_specs = part_spec
        out_bytes = 8 * g * 128 * 4

    flops = 3 * N * D + (2 * N if weighted else 0)
    bytes_accessed = N * D * (it_t + it_p) + out_bytes
    if weighted:
        bytes_accessed += N * w.dtype.itemsize

    out = pl.pallas_call(
        kernel,
        out_shape=out_shape,
        grid_spec=pltpu.PrefetchScalarGridSpec(
            num_scalar_prefetch=0,
            grid=(g,),
            in_specs=in_specs,
            out_specs=out_specs,
        ),
        compiler_params=pltpu.CompilerParams(
            dimension_semantics=("parallel",),      # independent blocks -> both TCs on v7x
            vmem_limit_bytes=vmem_limit,
        ),
        cost_estimate=pl.CostEstimate(
            flops=int(flops),
            transcendentals=int(N * D if log else 0),
            bytes_accessed=int(bytes_accessed),
        ),
    )(*args)

    if weighted:
        num_p, den_p = out
        # mean(w*l)/mean(w) == sum(w*l)/sum(w); masked tail rows add 0 to both sums.
        return jnp.sum(num_p[::8, 0]) / jnp.sum(den_p[::8, 0])
    return jnp.sum(out[::8, 0]) / jnp.float32(N)


def _reference(y_true, y_pred, sample_weight=None, log=False):
    yt = jnp.asarray(y_true, jnp.float32)
    yp = jnp.asarray(y_pred, jnp.float32)
    yp = jnp.log(yp) if log else yp
    outp = jnp.sum((yp - yt) ** 2, axis=1)
    if sample_weight is not None:
        sw = jnp.asarray(sample_weight, jnp.float32)
        return jnp.mean(outp * sw) / jnp.mean(sw)
    return jnp.mean(outp)


if __name__ == "__main__":
    key = jax.random.PRNGKey(0)
    k1, k2, k3, k4, k5, k6, k7, k8, k9 = jax.random.split(key, 9)

    # Case 1: batch=16, D=32 (divides cleanly, no tail mask).
    N, D = 16, 32
    y_true = jax.random.normal(k1, (N, D), jnp.float32)
    y_pred = jax.random.normal(k2, (N, D), jnp.float32)
    sw = jax.random.uniform(k3, (N,), jnp.float32, minval=0.5, maxval=1.5)

    loss_w = torch_loss_wrapper_mse(y_true, y_pred, sw)
    jax.block_until_ready(loss_w)
    assert jnp.allclose(loss_w, _reference(y_true, y_pred, sw), rtol=1e-5, atol=1e-5)

    loss_u = torch_loss_wrapper_mse(y_true, y_pred, None)
    jax.block_until_ready(loss_u)
    assert jnp.allclose(loss_u, _reference(y_true, y_pred, None), rtol=1e-5, atol=1e-5)

    # Case 2: ragged batch=13, D=7 (exercises the in-kernel tail mask on both paths).
    N2, D2 = 13, 7
    yt2 = jax.random.normal(k4, (N2, D2), jnp.float32)
    yp2 = jax.random.uniform(k5, (N2, D2), jnp.float32, minval=0.1, maxval=2.0)
    sw2 = jax.random.uniform(k6, (N2,), jnp.float32, minval=0.5, maxval=1.5)

    loss2_w = torch_loss_wrapper_mse(yt2, yp2, sw2)
    jax.block_until_ready(loss2_w)
    assert jnp.allclose(loss2_w, _reference(yt2, yp2, sw2), rtol=1e-5, atol=1e-5)

    loss2_u = torch_loss_wrapper_mse(yt2, yp2, None)
    jax.block_until_ready(loss2_u)
    assert jnp.allclose(loss2_u, _reference(yt2, yp2, None), rtol=1e-5, atol=1e-5)

    # Case 3: log=True (positive predictions), weighted + unweighted, ragged batch.
    loss3_w = torch_loss_wrapper_mse(yt2, yp2, sw2, log=True)
    jax.block_until_ready(loss3_w)
    assert jnp.allclose(loss3_w, _reference(yt2, yp2, sw2, log=True), rtol=1e-5, atol=1e-5)

    loss3_u = torch_loss_wrapper_mse(yt2, yp2, None, log=True)
    jax.block_until_ready(loss3_u)
    assert jnp.allclose(loss3_u, _reference(yt2, yp2, None, log=True), rtol=1e-5, atol=1e-5)

    # Case 4: bf16 inputs stay bf16 in HBM; in-kernel upcast to f32 (ragged batch=24, D=16).
    N3, D3 = 24, 16
    yt3 = jax.random.normal(k7, (N3, D3), jnp.float32).astype(jnp.bfloat16)
    yp3 = jax.random.normal(k8, (N3, D3), jnp.float32).astype(jnp.bfloat16)
    sw3 = jax.random.uniform(k9, (N3,), jnp.float32, minval=0.5, maxval=1.5)

    loss4_w = torch_loss_wrapper_mse(yt3, yp3, sw3)
    jax.block_until_ready(loss4_w)
    assert jnp.allclose(loss4_w, _reference(yt3, yp3, sw3), rtol=1e-5, atol=1e-5)

    loss4_u = torch_loss_wrapper_mse(yt3, yp3, None)
    jax.block_until_ready(loss4_u)
    assert jnp.allclose(loss4_u, _reference(yt3, yp3, None), rtol=1e-5, atol=1e-5)

    print("KERNEL_OK")
</pallas_src>

<mosaic_0001>
module attributes {stable_mosaic.version = 11 : i64} {
  func.func @_mse_partial_kernel(%arg0: i32, %arg1: memref<16x32xf32, #tpu.memory_space<vmem>>, %arg2: memref<16x32xf32, #tpu.memory_space<vmem>>, %arg3: memref<16x1xf32, #tpu.memory_space<vmem>>, %arg4: memref<8x128xf32, #tpu.memory_space<vmem>>, %arg5: memref<8x128xf32, #tpu.memory_space<vmem>>) attributes {dimension_semantics = [#tpu.dimension_semantics<parallel>], iteration_bounds = array<i64: 1>, scalar_prefetch = 0 : i64, scratch_operands = 0 : i64, tpu.core_type = #tpu.core_type<tc>, window_params = [{transform_indices = @transform_0, window_bounds = array<i64: 16, 32>}, {transform_indices = @transform_1, window_bounds = array<i64: 16, 32>}, {transform_indices = @transform_2, window_bounds = array<i64: 16, 1>}, {transform_indices = @transform_3, window_bounds = array<i64: 8, 128>}, {transform_indices = @transform_4, window_bounds = array<i64: 8, 128>}]} {
    %c0 = arith.constant 0 : index
    %c0_0 = arith.constant 0 : index
    %0 = vector.load %arg2[%c0, %c0_0] : memref<16x32xf32, #tpu.memory_space<vmem>>, vector<16x32xf32>
    %c0_1 = arith.constant 0 : index
    %c0_2 = arith.constant 0 : index
    %1 = vector.load %arg1[%c0_1, %c0_2] : memref<16x32xf32, #tpu.memory_space<vmem>>, vector<16x32xf32>
    %2 = arith.subf %0, %1 : vector<16x32xf32>
    %3 = arith.mulf %2, %2 : vector<16x32xf32>
    %c0_3 = arith.constant 0 : index
    %c0_4 = arith.constant 0 : index
    %4 = vector.load %arg3[%c0_3, %c0_4] : memref<16x1xf32, #tpu.memory_space<vmem>>, vector<16x1xf32>
    %cst = arith.constant dense<0.000000e+00> : vector<16xf32>
    %5 = vector.multi_reduction <add>, %3, %cst [1] : vector<16x32xf32> to vector<16xf32>
    %6 = vector.shape_cast %5 : vector<16xf32> to vector<16x1xf32>
    %7 = arith.mulf %6, %4 : vector<16x1xf32>
    %8 = vector.shape_cast %7 : vector<16x1xf32> to vector<1x16x1xf32>
    %cst_5 = arith.constant dense<0.000000e+00> : vector<1xf32>
    %9 = vector.multi_reduction <add>, %8, %cst_5 [1, 2] : vector<1x16x1xf32> to vector<1xf32>
    %10 = vector.shape_cast %9 : vector<1xf32> to vector<1x1x1xf32>
    %11 = vector.extract %10[0, 0, 0] : f32 from vector<1x1x1xf32>
    %12 = vector.broadcast %11 : f32 to vector<1x1xf32>
    %13 = vector.shape_cast %4 : vector<16x1xf32> to vector<1x16x1xf32>
    %cst_6 = arith.constant dense<0.000000e+00> : vector<1xf32>
    %14 = vector.multi_reduction <add>, %13, %cst_6 [1, 2] : vector<1x16x1xf32> to vector<1xf32>
    %15 = vector.shape_cast %14 : vector<1xf32> to vector<1x1x1xf32>
    %16 = vector.extract %15[0, 0, 0] : f32 from vector<1x1x1xf32>
    %17 = vector.broadcast %16 : f32 to vector<1x1xf32>
    %18 = vector.shape_cast %12 : vector<1x1xf32> to vector<1x1xf32>
    %19 = vector.broadcast %18 : vector<1x1xf32> to vector<8x128xf32>
    %c0_7 = arith.constant 0 : index
    %c0_8 = arith.constant 0 : index
    %20 = vector.load %arg4[%c0_7, %c0_8] : memref<8x128xf32, #tpu.memory_space<vmem>>, vector<8x128xf32>
    tpu.vector_store %arg4[%c0_7, %c0_8], %19 {strides = array<i32>} : memref<8x128xf32, #tpu.memory_space<vmem>>, vector<8x128xf32>,
    %21 = vector.shape_cast %17 : vector<1x1xf32> to vector<1x1xf32>
    %22 = vector.broadcast %21 : vector<1x1xf32> to vector<8x128xf32>
    %c0_9 = arith.constant 0 : index
    %c0_10 = arith.constant 0 : index
    %23 = vector.load %arg5[%c0_9, %c0_10] : memref<8x128xf32, #tpu.memory_space<vmem>>, vector<8x128xf32>
    tpu.vector_store %arg5[%c0_9, %c0_10], %22 {strides = array<i32>} : memref<8x128xf32, #tpu.memory_space<vmem>>, vector<8x128xf32>,
    return
  }
  func.func @transform_0(%arg0: i32) -> (i32, i32) {
    %c0_i32 = arith.constant 0 : i32
    %c0_i32_0 = arith.constant 0 : i32
    return %arg0, %c0_i32 : i32, i32
  }
  func.func @transform_1(%arg0: i32) -> (i32, i32) {
    %c0_i32 = arith.constant 0 : i32
    %c0_i32_0 = arith.constant 0 : i32
    return %arg0, %c0_i32 : i32, i32
  }
  func.func @transform_2(%arg0: i32) -> (i32, i32) {
    %c0_i32 = arith.constant 0 : i32
    %c0_i32_0 = arith.constant 0 : i32
    return %arg0, %c0_i32 : i32, i32
  }
  func.func @transform_3(%arg0: i32) -> (i32, i32) {
    %c0_i32 = arith.constant 0 : i32
    %c0_i32_0 = arith.constant 0 : i32
    return %arg0, %c0_i32 : i32, i32
  }
  func.func @transform_4(%arg0: i32) -> (i32, i32) {
    %c0_i32 = arith.constant 0 : i32
    %c0_i32_0 = arith.constant 0 : i32
    return %arg0, %c0_i32 : i32, i32
  }
}

</mosaic_0001>

<llo_original>
// kernel: tpu_custom_call.1
$region0: #{tpu_custom_call.1}
  #allocation0 [shape = 'u32[]', space=smem, size = 0x4, offset = 0x4, fixed_abs, tag = 'smem constant byte address 0x4 - core index']
  #allocation1 [shape = 'u32[144,128]{1,0:T(1,128)}', space=vmem, size = 0x12000, scoped, tag = 'internal scratch']
  %s0 = inlined_call_operand.vmem [shape: f32[16,32], index: 0, kind: input, shape index: {}]
  %s1 = inlined_call_operand.hbm [shape: f32[16,32], index: 1, kind: input, shape index: {}]
  %s2 = inlined_call_operand.vmem [shape: f32[16,1], index: 2, kind: input, shape index: {}]
  %s3 = inlined_call_operand.hbm [shape: f32[8,128], index: 3, kind: output, shape index: {0}]
  %s4 = inlined_call_operand.hbm [shape: f32[8,128], index: 4, kind: output, shape index: {1}]
  %5 = xla_tuple %s3, %s4
  %s6 = sld [smem:[#allocation0]]
  $region34: #{tpu_custom_call.1} parent=0
    _
  %s8 = ssub.s32 1, %s6
  %s9 = scalar_select 0, %s8, %s6
  $region1: #{tpu_custom_call.1} parent=0
    #allocation2 [shape = 'u8[8192]{0}', space=vmem, size = 0x2000, scoped, tag = 'input window, operand 1, single buffered']
    #allocation3 [shape = 's32[1]{0}', space=sflag, size = 0x4, scoped, tag = 'scoped memory for tpu_custom_call.1']
    #allocation4 [shape = 's32[1]{0}', space=sflag, size = 0x4, scoped, tag = 'scoped memory for tpu_custom_call.1']
    #allocation5 [shape = 'u8[4096]{0}', space=vmem, size = 0x1000, scoped, tag = 'output window, operand 0, single buffered']
    #allocation6 [shape = 'u8[4096]{0}', space=vmem, size = 0x1000, scoped, tag = 'output window, operand 1, single buffered']
    #allocation7 [shape = 's32[1]{0}', space=sflag, size = 0x4, scoped, tag = 'scoped memory for tpu_custom_call.1']
    %10 = vsyncpa [#allocation3], 0
    %11 = vsyncpa [#allocation4], 0
    %12 = vsyncpa [#allocation7], 0
    // Predicated region
    $region2: #{tpu_custom_call.1} parent=1 // pred_check
      _
    $region3: #{tpu_custom_call.1} parent=1 // pred_check_branch
      %14 = sbr.rel (0) target = $region5
    $region4: #{tpu_custom_call.1} parent=1 // pred_region
      _
    $region5: #{tpu_custom_call.1} parent=1 // pred_fallthru
      _
    // Predicated region
    $region6: #{tpu_custom_call.1} parent=1 // pred_check
      _
    $region7: #{tpu_custom_call.1} parent=1 // pred_check_branch
      %16 = sbr.rel (0) target = $region9
    $region8: #{tpu_custom_call.1} parent=1 // pred_region
      %s18 = ssub.s32 256, 256
      %19 = vsyncadd [#allocation3], %s18
      %s20 = sshll.u32 [#allocation2], 4
      %s21 = int_to_ptr.vmem [resolvable:$true] %s20
      %26 = dma.hbm_to_vmem [thread:$0]  %s1, 256, %s21, [#allocation3], 128, 128, 8
    $region9: #{tpu_custom_call.1} parent=1 // pred_fallthru
      _
    // Predicated region
    $region10: #{tpu_custom_call.1} parent=1 // pred_check
      _
    $region11: #{tpu_custom_call.1} parent=1 // pred_check_branch
      %28 = sbr.rel (0) target = $region13
    $region12: #{tpu_custom_call.1} parent=1 // pred_region
      _
    $region13: #{tpu_custom_call.1} parent=1 // pred_fallthru
      _
    // Predicated region
    $region14: #{tpu_custom_call.1} parent=1 // pred_check
      _
    $region15: #{tpu_custom_call.1} parent=1 // pred_check_branch
      %30 = sbr.rel (0) target = $region17
    $region16: #{tpu_custom_call.1} parent=1 // pred_region
      %31 = dma.done [#allocation3], 256
    $region17: #{tpu_custom_call.1} parent=1 // pred_fallthru
      _
    %v32 = vld [vmem:[#allocation2] sm:$0xff]
    %v33 = vld [vmem:[#allocation2 + $0x8] sm:$0xff]
    %v34 = vld [vmem:[%s0] sm:$0xff]
    %v35 = vld [vmem:[%s0 + $0x8] sm:$0xff]
    %v36 = vsub.f32 %v32, %v34
    %v37 = vsub.f32 %v33, %v35
    %v38 = vmul.f32 %v36, %v36
    %v39 = vmul.f32 %v37, %v37
    %v40 = vld [vmem:[%s2] sm:$0xff]
    %v41 = vld [vmem:[%s2 + $0x8] sm:$0xff]
    %vm42 = vcmask 261120
    %v43 = vsel %vm42, %v38, 0.0
    %44 = vadd.xlane.f32.xlu0 %v43
    %v45 = vpop.xlane.xlu0 %44
    %v46 = vsel %vm42, %v39, 0.0
    %47 = vadd.xlane.f32.xlu0 %v46
    %v48 = vpop.xlane.xlu0 %47
    %v49 = vmul.f32 %v45, %v40
    %v50 = vmul.f32 %v48, %v41
    %vm51 = vcmask 7168
    %v52 = vsel %vm51, %v49, 0.0
    %v53 = vsel %vm51, %v50, 0.0
    %v54 = vadd.f32 %v52, %v53
    %55 = vadd.xlane.f32.xlu0 %v54
    %v56 = vpop.xlane.xlu0 %55
    %v57 = vrot.slane %v56, 4
    %v58 = vadd.f32 %v56, %v57
    %v59 = vrot.slane %v58, 2
    %v60 = vadd.f32 %v58, %v59
    %v61 = vrot.slane %v60, 1
    %v62 = vadd.f32 %v60, %v61
    %s63 = vtos %v62
    %v64 = vsel %vm51, %v40, 0.0
    %v65 = vsel %vm51, %v41, 0.0
    %v66 = vadd.f32 %v64, %v65
    %67 = vadd.xlane.f32.xlu0 %v66
    %v68 = vpop.xlane.xlu0 %67
    %v69 = vrot.slane %v68, 4
    %v70 = vadd.f32 %v68, %v69
    %v71 = vrot.slane %v70, 2
    %v72 = vadd.f32 %v70, %v71
    %v73 = vrot.slane %v72, 1
    %v74 = vadd.f32 %v72, %v73
    %s75 = vtos %v74
    %v76 = vstv %s63
    %77 = vst [vmem:[#allocation5] sm:$0xff] %v76
    %v78 = vstv %s75
    %79 = vst [vmem:[#allocation6] sm:$0xff] %v78
    // Predicated region
    $region18: #{tpu_custom_call.1} parent=1 // pred_check
      _
    $region19: #{tpu_custom_call.1} parent=1 // pred_check_branch
      %81 = sbr.rel (0) target = $region21
    $region20: #{tpu_custom_call.1} parent=1 // pred_region
      %s83 = ssub.s32 128, 128
      %84 = vsyncadd [#allocation4], %s83
      %s86 = sshll.u32 [#allocation5], 4
      %s87 = int_to_ptr.vmem [resolvable:$true] %s86
      %89 = dma.vmem_to_hbm [thread:$0]  %s87, 128, %s3, [#allocation4]
    $region21: #{tpu_custom_call.1} parent=1 // pred_fallthru
      _
    // Predicated region
    $region22: #{tpu_custom_call.1} parent=1 // pred_check
      _
    $region23: #{tpu_custom_call.1} parent=1 // pred_check_branch
      %91 = sbr.rel (0) target = $region25
    $region24: #{tpu_custom_call.1} parent=1 // pred_region
      %s93 = ssub.s32 128, 128
      %94 = vsyncadd [#allocation7], %s93
      %s96 = sshll.u32 [#allocation6], 4
      %s97 = int_to_ptr.vmem [resolvable:$true] %s96
      %99 = dma.vmem_to_hbm [thread:$0]  %s97, 128, %s4, [#allocation7]
    $region25: #{tpu_custom_call.1} parent=1 // pred_fallthru
      _
    // Predicated region
    $region26: #{tpu_custom_call.1} parent=1 // pred_check
      _
    $region27: #{tpu_custom_call.1} parent=1 // pred_check_branch
      %101 = sbr.rel (0) target = $region29
    $region28: #{tpu_custom_call.1} parent=1 // pred_region
      %102 = dma.done [#allocation4], 128
    $region29: #{tpu_custom_call.1} parent=1 // pred_fallthru
      _
    // Predicated region
    $region30: #{tpu_custom_call.1} parent=1 // pred_check
      _
    $region31: #{tpu_custom_call.1} parent=1 // pred_check_branch
      %104 = sbr.rel (0) target = $region33
    $region32: #{tpu_custom_call.1} parent=1 // pred_region
      %105 = dma.done [#allocation7], 128
    $region33: #{tpu_custom_call.1} parent=1 // pred_fallthru
      _
    %106 = vsyncpa [#allocation3], 1
    %107 = vsyncpa [#allocation4], 1
    %108 = vsyncpa [#allocation7], 1

</llo_original>
